<compile_context>
chip_gen: v7x
topology: tpu7x:2x2x1
jax: 0.10.0
libtpu: 0.0.40
codegen_flags: <defaults>
</compile_context>

<pallas_src>
import math

import jax
import jax.numpy as jnp
from jax.experimental import pallas as pl
from jax.experimental.pallas import tpu as pltpu

LN_EPS = 1e-5                    # nn.LayerNorm default
NORM_EPS_SQ = 1e-12 * 1e-12      # F.normalize eps, applied to the squared norm
INV_SQRT2 = 1.0 / math.sqrt(2.0)


# ----------------------------------------------------------------------------
# In-kernel helpers (operate on values, not refs)
# ----------------------------------------------------------------------------
def _mlp(x_f32, w1_bf16, b1, gamma, beta, w2_bf16, b2, approx_gelu):
    """Linear -> LayerNorm -> GELU -> Linear.

    Matmul operands in bf16 (f32 accumulation); LN/GELU math in f32.
    """
    h = jnp.dot(x_f32.astype(jnp.bfloat16), w1_bf16,
                preferred_element_type=jnp.float32) + b1
    mu = jnp.mean(h, axis=-1, keepdims=True)
    var = jnp.mean(jnp.square(h - mu), axis=-1, keepdims=True)   # biased, like torch
    hn = (h - mu) * jax.lax.rsqrt(var + LN_EPS)
    hn = hn * gamma + beta
    if approx_gelu:
        # tanh approximation routes the transcendental to the EUP slot (v5e win).
        ge = 0.5 * hn * (1.0 + jnp.tanh(0.7978845608028654
                                        * (hn + 0.044715 * hn * hn * hn)))
    else:
        ge = 0.5 * hn * (1.0 + jax.lax.erf(hn * INV_SQRT2))       # exact, matches torch
    return jnp.dot(ge.astype(jnp.bfloat16), w2_bf16,
                   preferred_element_type=jnp.float32) + b2


def _l2_normalize(x):
    # F.normalize: x / max(||x||, eps) == x * rsqrt(max(||x||^2, eps^2))
    sumsq = jnp.sum(x * x, axis=-1, keepdims=True)
    return x * jax.lax.rsqrt(jnp.maximum(sumsq, NORM_EPS_SQ))


# ----------------------------------------------------------------------------
# Pass A: pool -> visual/text proj -> distill head -> normalized rows
# ----------------------------------------------------------------------------
def _make_embed_kernel(pool_visual, pool_text, channels_last, temperature,
                       approx_gelu):
    inv_temp = 1.0 / float(temperature)

    def kernel(vis_ref, txt_ref, w1v_ref, w1t_ref, w1d_ref, w2s_ref,
               v2e_ref, ve_ref,
               vemb_ref, temb_ref, demb_ref, dn_ref, tn_ref):
        v2e = v2e_ref[...]                       # (9, 2E) f32: b1/gamma/beta x3
        ve = ve_ref[...]                         # (3, E)  f32: b2 x3

        vis = vis_ref[...].astype(jnp.float32)
        if pool_visual:
            vis = jnp.mean(vis, axis=(1 if channels_last else 2))
        txt = txt_ref[...].astype(jnp.float32)
        if pool_text:
            txt = jnp.mean(txt, axis=1)

        vemb = _mlp(vis, w1v_ref[...], v2e[0:1], v2e[1:2], v2e[2:3],
                    w2s_ref[0], ve[0:1], approx_gelu)
        temb = _mlp(txt, w1t_ref[...], v2e[3:4], v2e[4:5], v2e[5:6],
                    w2s_ref[1], ve[1:2], approx_gelu)
        demb = _mlp(vemb, w1d_ref[...], v2e[6:7], v2e[7:8], v2e[8:9],
                    w2s_ref[2], ve[2:3], approx_gelu)

        vemb_ref[...] = vemb
        temb_ref[...] = temb
        demb_ref[...] = demb
        tn_ref[...] = _l2_normalize(temb)
        # Fold 1/temperature into the normalized distill rows once (O(B*E)),
        # instead of scaling the (B,B) sim and the diagonal.
        dn_ref[...] = _l2_normalize(demb) * inv_temp

    return kernel


def _make_visual_only_kernel(pool_visual, channels_last, approx_gelu):
    def kernel(vis_ref, w1v_ref, w2s_ref, v2e_ref, ve_ref, out_ref):
        vis = vis_ref[...].astype(jnp.float32)
        if pool_visual:
            vis = jnp.mean(vis, axis=(1 if channels_last else 2))
        v2e = v2e_ref[...]
        ve = ve_ref[...]
        out_ref[...] = _mlp(vis, w1v_ref[...], v2e[0:1], v2e[1:2], v2e[2:3],
                            w2s_ref[0], ve[0:1], approx_gelu)
    return kernel


# ----------------------------------------------------------------------------
# Pass B: flash-style online logsumexp over text-row blocks -> per-row CE
# ----------------------------------------------------------------------------
def _loss_kernel(dn_ref, tn_ref, out_ref, m_ref, l_ref, diag_ref):
    j = pl.program_id(1)

    @pl.when(j == 0)
    def _():
        m_ref[...] = jnp.full_like(m_ref, -jnp.inf)
        l_ref[...] = jnp.zeros_like(l_ref)
        diag_ref[...] = jnp.zeros_like(diag_ref)

    dn = dn_ref[...]                              # (TB, E) f32, already /temperature
    tn = tn_ref[...]                              # (TB, E) f32
    # f32 matmul: the loss matmul is O(B^2*E) << MLP matmuls, so keep full
    # precision and stay consistent with the f32 diagonal below.
    s = jax.lax.dot_general(dn, tn, dimension_numbers=(((1,), (1,)), ((), ())),
                            preferred_element_type=jnp.float32)   # (TB, TB)

    m_prev = m_ref[...]
    m_new = jnp.maximum(m_prev, jnp.max(s, axis=-1, keepdims=True))
    l_ref[...] = (l_ref[...] * jnp.exp(m_prev - m_new)
                  + jnp.sum(jnp.exp(s - m_new), axis=-1, keepdims=True))
    m_ref[...] = m_new

    @pl.when(j == pl.program_id(0))               # block holding the diagonal
    def _():
        diag_ref[...] = jnp.sum(dn * tn, axis=-1, keepdims=True)

    @pl.when(j == pl.num_programs(1) - 1)
    def _():
        out_ref[...] = m_ref[...] + jnp.log(l_ref[...]) - diag_ref[...]


# ----------------------------------------------------------------------------
# Tiling / VMEM budgeting helpers
# ----------------------------------------------------------------------------
def _round_up(x, m):
    return (x + m - 1) // m * m


def _padded_row_bytes(tail_shape, itemsize=4):
    """Approx padded bytes of one batch row ((8,128)-tiled last two dims)."""
    dims = list(tail_shape) if len(tail_shape) > 0 else [1]
    dims[-1] = _round_up(dims[-1], 128)
    if len(dims) >= 2:
        dims[-2] = _round_up(dims[-2], 8)
    n = 1
    for d in dims:
        n *= d
    return n * itemsize


def _per_row_bytes(vis_tail, txt_tail, embed_dim):
    acts = 4 * (6 * _round_up(2 * embed_dim, 128) + 8 * _round_up(embed_dim, 128))
    io = (2 * (_padded_row_bytes(vis_tail) + _padded_row_bytes(txt_tail))
          + 2 * 5 * 4 * _round_up(embed_dim, 128))
    return acts + io


def _weight_bytes(prepared):
    total = 0
    for v in prepared.values():
        dims = list(v.shape)
        itemsize = v.dtype.itemsize
        dims[-1] = _round_up(dims[-1], 128)
        if len(dims) >= 2:
            dims[-2] = _round_up(dims[-2], 8 * max(1, 4 // itemsize))
        n = 1
        for d in dims:
            n *= d
        total += n * itemsize
    return total


def _pick_tile_b(batch, per_row_bytes, budget_bytes=20 << 20):
    """Largest batch tile (multiple of 8, <=256) dividing `batch` within budget."""
    if batch <= 8:
        return batch
    for t in (256, 128, 64, 32, 16, 8):
        if batch % t == 0 and t * per_row_bytes <= budget_bytes:
            return t
    # TODO(synk): pad ragged batches to a multiple of 8 instead of one big block.
    return batch


def _tiled_spec(full_shape, tile_b):
    n = len(full_shape)
    block = (tile_b,) + tuple(full_shape[1:])
    return pl.BlockSpec(block, lambda i, _n=n: (i,) + (0,) * (_n - 1))


def _const_spec(full_shape):
    n = len(full_shape)
    return pl.BlockSpec(tuple(full_shape), lambda i, _n=n: (0,) * _n)


# ----------------------------------------------------------------------------
# Parameter preparation (done ONCE, not per forward call)
# ----------------------------------------------------------------------------
def prepare_params(params):
    """Pack biases / LN vectors and pre-cast matmul weights to bf16."""
    vp, tp, dp = params["visual_proj"], params["text_proj"], params["distill_head"]

    def row(x):
        return jnp.reshape(x, (1, -1)).astype(jnp.float32)

    vecs_2e = jnp.concatenate(
        [row(vp["b1"]), row(vp["gamma"]), row(vp["beta"]),
         row(tp["b1"]), row(tp["gamma"]), row(tp["beta"]),
         row(dp["b1"]), row(dp["gamma"]), row(dp["beta"])], axis=0)    # (9, 2E)
    vecs_e = jnp.concatenate([row(vp["b2"]), row(tp["b2"]), row(dp["b2"])],
                             axis=0)                                   # (3, E)
    w2_stack = jnp.stack([vp["w2"], tp["w2"], dp["w2"]]).astype(jnp.bfloat16)

    return {
        "w1_visual": vp["w1"].astype(jnp.bfloat16),
        "w1_text": tp["w1"].astype(jnp.bfloat16),
        "w1_distill": dp["w1"].astype(jnp.bfloat16),
        "w2_stack": w2_stack,                 # (3, 2E, E) bf16
        "vecs_2e": vecs_2e,                   # (9, 2E) f32
        "vecs_e": vecs_e,                     # (3, E)  f32
    }


# ----------------------------------------------------------------------------
# Forward wrapper
# ----------------------------------------------------------------------------
def llm_knowledge_distillation_forward(prepared, visual_features,
                                       text_features=None, temperature=2.0,
                                       approx_gelu=False):
    # TODO(synk): DistilBert text encoder path (encode_text) not implemented;
    # text_features must be provided directly.
    pool_visual = visual_features.ndim == 4
    channels_last = False
    if pool_visual:
        B, C, H, W = visual_features.shape
        if C >= 128:
            # Production layout: lane-dense channels, pool over spatial axis.
            channels_last = True
            vis_in = jnp.transpose(visual_features.reshape(B, C, H * W), (0, 2, 1))
        else:
            vis_in = visual_features.reshape(B, C, H * W)   # lane-dense H*W
    else:
        vis_in = visual_features
        B = vis_in.shape[0]

    embed_dim = prepared["vecs_e"].shape[1]
    wbytes = _weight_bytes(prepared)
    vis_tail = vis_in.shape[1:]
    txt_tail = text_features.shape[1:] if text_features is not None else ()

    per_row = _per_row_bytes(vis_tail, txt_tail, embed_dim)
    tile_b = _pick_tile_b(B, per_row)
    nb = B // tile_b
    vmem_limit = int(min(max(tile_b * per_row + 2 * wbytes + (4 << 20), 16 << 20),
                         48 << 20))
    cparams = pltpu.CompilerParams(dimension_semantics=("parallel",),
                                   vmem_limit_bytes=vmem_limit)

    if text_features is None:
        vemb = pl.pallas_call(
            _make_visual_only_kernel(pool_visual, channels_last, approx_gelu),
            out_shape=jax.ShapeDtypeStruct((B, embed_dim), jnp.float32),
            grid=(nb,),
            in_specs=[
                _tiled_spec(vis_in.shape, tile_b),
                _const_spec(prepared["w1_visual"].shape),
                _const_spec(prepared["w2_stack"].shape),
                _const_spec(prepared["vecs_2e"].shape),
                _const_spec(prepared["vecs_e"].shape),
            ],
            out_specs=_tiled_spec((B, embed_dim), tile_b),
            compiler_params=cparams,
        )(vis_in, prepared["w1_visual"], prepared["w2_stack"],
          prepared["vecs_2e"], prepared["vecs_e"])
        return {"visual_embed": vemb, "text_embed": None,
                "distill_loss": jnp.float32(0.0)}

    pool_text = text_features.ndim == 3

    # Pass A: batch-tiled MLPs + normalization. Weights have constant
    # index_maps so they are DMA'd once and stay VMEM-resident across steps.
    # TODO(synk): for embed_dim not a multiple of 128, zero-pad the w2/b2
    # output dim wrapper-side for lane-dense stores at production sizes.
    vemb, temb, demb, dn_scaled, tn = pl.pallas_call(
        _make_embed_kernel(pool_visual, pool_text, channels_last,
                           float(temperature), approx_gelu),
        out_shape=tuple(jax.ShapeDtypeStruct((B, embed_dim), jnp.float32)
                        for _ in range(5)),
        grid=(nb,),
        in_specs=[
            _tiled_spec(vis_in.shape, tile_b),
            _tiled_spec(text_features.shape, tile_b),
            _const_spec(prepared["w1_visual"].shape),
            _const_spec(prepared["w1_text"].shape),
            _const_spec(prepared["w1_distill"].shape),
            _const_spec(prepared["w2_stack"].shape),
            _const_spec(prepared["vecs_2e"].shape),
            _const_spec(prepared["vecs_e"].shape),
        ],
        out_specs=tuple(_tiled_spec((B, embed_dim), tile_b) for _ in range(5)),
        compiler_params=cparams,
    )(vis_in, text_features, prepared["w1_visual"], prepared["w1_text"],
      prepared["w1_distill"], prepared["w2_stack"], prepared["vecs_2e"],
      prepared["vecs_e"])

    # Pass B: online logsumexp over text-row blocks -> per-row (lse - diag),
    # reduced wrapper-side (no cross-iteration scalar accumulator, no (B,B)
    # materialized sim matrix).
    per_row_ce = pl.pallas_call(
        _loss_kernel,
        out_shape=jax.ShapeDtypeStruct((B, 1), jnp.float32),
        grid=(nb, nb),
        in_specs=[
            pl.BlockSpec((tile_b, embed_dim), lambda i, j: (i, 0)),
            pl.BlockSpec((tile_b, embed_dim), lambda i, j: (j, 0)),
        ],
        out_specs=pl.BlockSpec((tile_b, 1), lambda i, j: (i, 0)),
        scratch_shapes=[pltpu.VMEM((tile_b, 1), jnp.float32)] * 3,
        compiler_params=pltpu.CompilerParams(
            dimension_semantics=("parallel", "arbitrary"),
            vmem_limit_bytes=32 << 20),
    )(dn_scaled, tn)

    distill_loss = jnp.mean(per_row_ce)

    return {"visual_embed": vemb, "text_embed": temb,
            "distill_embed": demb, "distill_loss": distill_loss}


# ----------------------------------------------------------------------------
# Deterministic parameter init (PyTorch Linear-style uniform bounds)
# ----------------------------------------------------------------------------
def init_linear(key, din, dout):
    kw, kb = jax.random.split(key)
    bound = 1.0 / math.sqrt(din)
    w = jax.random.uniform(kw, (din, dout), jnp.float32, -bound, bound)
    b = jax.random.uniform(kb, (dout,), jnp.float32, -bound, bound)
    return w, b


def init_proj(key, din, embed_dim):
    h = embed_dim * 2
    k1, k2 = jax.random.split(key)
    w1, b1 = init_linear(k1, din, h)
    w2, b2 = init_linear(k2, h, embed_dim)
    return {"w1": w1, "b1": b1,
            "gamma": jnp.ones((h,), jnp.float32),
            "beta": jnp.zeros((h,), jnp.float32),
            "w2": w2, "b2": b2}


if __name__ == "__main__":
    key = jax.random.PRNGKey(0)
    k_v, k_t, k_p1, k_p2, k_p3 = jax.random.split(key, 5)

    B, C, H, W = 2, 4, 16, 16          # visual_dim = C = 4
    S, text_dim, embed_dim = 8, 32, 32

    visual_features = jax.random.normal(k_v, (B, C, H, W), jnp.float32)
    text_features = jax.random.normal(k_t, (B, S, text_dim), jnp.float32)

    params = {
        "visual_proj": init_proj(k_p1, C, embed_dim),
        "text_proj": init_proj(k_p2, text_dim, embed_dim),
        "distill_head": init_proj(k_p3, embed_dim, embed_dim),
    }
    prepared = prepare_params(params)   # one-time packing + bf16 cast

    out = llm_knowledge_distillation_forward(
        prepared, visual_features, text_features, temperature=2.0
    )
    jax.block_until_ready(out)

    assert out["visual_embed"].shape == (B, embed_dim)
    assert out["text_embed"].shape == (B, embed_dim)
    assert out["distill_embed"].shape == (B, embed_dim)
    assert out["distill_loss"].shape == ()
    assert bool(jnp.isfinite(out["distill_loss"]))
    print("KERNEL_OK")
</pallas_src>

<mosaic_0001>
module attributes {stable_mosaic.version = 11 : i64} {
  func.func @kernel(%arg0: i32, %arg1: memref<2x4x256xf32, #tpu.memory_space<vmem>>, %arg2: memref<2x8x32xf32, #tpu.memory_space<vmem>>, %arg3: memref<4x64xbf16, #tpu.memory_space<vmem>>, %arg4: memref<32x64xbf16, #tpu.memory_space<vmem>>, %arg5: memref<32x64xbf16, #tpu.memory_space<vmem>>, %arg6: memref<3x64x32xbf16, #tpu.memory_space<vmem>>, %arg7: memref<9x64xf32, #tpu.memory_space<vmem>>, %arg8: memref<3x32xf32, #tpu.memory_space<vmem>>, %arg9: memref<2x32xf32, #tpu.memory_space<vmem>>, %arg10: memref<2x32xf32, #tpu.memory_space<vmem>>, %arg11: memref<2x32xf32, #tpu.memory_space<vmem>>, %arg12: memref<2x32xf32, #tpu.memory_space<vmem>>, %arg13: memref<2x32xf32, #tpu.memory_space<vmem>>) attributes {dimension_semantics = [#tpu.dimension_semantics<parallel>], iteration_bounds = array<i64: 1>, scalar_prefetch = 0 : i64, scratch_operands = 0 : i64, tpu.core_type = #tpu.core_type<tc>, window_params = [{transform_indices = @transform_0, window_bounds = array<i64: 2, 4, 256>}, {transform_indices = @transform_1, window_bounds = array<i64: 2, 8, 32>}, {pipeline_mode = #tpu.pipeline_mode<synchronous>, transform_indices = @transform_2, window_bounds = array<i64: 4, 64>}, {pipeline_mode = #tpu.pipeline_mode<synchronous>, transform_indices = @transform_3, window_bounds = array<i64: 32, 64>}, {pipeline_mode = #tpu.pipeline_mode<synchronous>, transform_indices = @transform_4, window_bounds = array<i64: 32, 64>}, {pipeline_mode = #tpu.pipeline_mode<synchronous>, transform_indices = @transform_5, window_bounds = array<i64: 3, 64, 32>}, {pipeline_mode = #tpu.pipeline_mode<synchronous>, transform_indices = @transform_6, window_bounds = array<i64: 9, 64>}, {pipeline_mode = #tpu.pipeline_mode<synchronous>, transform_indices = @transform_7, window_bounds = array<i64: 3, 32>}, {transform_indices = @transform_8, window_bounds = array<i64: 2, 32>}, {transform_indices = @transform_9, window_bounds = array<i64: 2, 32>}, {transform_indices = @transform_10, window_bounds = array<i64: 2, 32>}, {transform_indices = @transform_11, window_bounds = array<i64: 2, 32>}, {transform_indices = @transform_12, window_bounds = array<i64: 2, 32>}]} {
    %c0 = arith.constant 0 : index
    %c0_0 = arith.constant 0 : index
    %0 = vector.load %arg7[%c0, %c0_0] : memref<9x64xf32, #tpu.memory_space<vmem>>, vector<9x64xf32>
    %c0_1 = arith.constant 0 : index
    %c0_2 = arith.constant 0 : index
    %1 = vector.load %arg8[%c0_1, %c0_2] : memref<3x32xf32, #tpu.memory_space<vmem>>, vector<3x32xf32>
    %c0_3 = arith.constant 0 : index
    %c0_4 = arith.constant 0 : index
    %c0_5 = arith.constant 0 : index
    %2 = vector.load %arg1[%c0_3, %c0_4, %c0_5] : memref<2x4x256xf32, #tpu.memory_space<vmem>>, vector<2x4x256xf32>
    %cst = arith.constant dense<0.000000e+00> : vector<2x4xf32>
    %3 = vector.multi_reduction <add>, %2, %cst [2] : vector<2x4x256xf32> to vector<2x4xf32>
    %cst_6 = arith.constant 2.560000e+02 : f32
    %4 = vector.broadcast %cst_6 : f32 to vector<2x4xf32>
    %5 = arith.divf %3, %4 : vector<2x4xf32>
    %c0_7 = arith.constant 0 : index
    %c0_8 = arith.constant 0 : index
    %c0_9 = arith.constant 0 : index
    %6 = vector.load %arg2[%c0_7, %c0_8, %c0_9] : memref<2x8x32xf32, #tpu.memory_space<vmem>>, vector<2x8x32xf32>
    %cst_10 = arith.constant dense<0.000000e+00> : vector<2x32xf32>
    %7 = vector.multi_reduction <add>, %6, %cst_10 [1] : vector<2x8x32xf32> to vector<2x32xf32>
    %cst_11 = arith.constant 8.000000e+00 : f32
    %8 = vector.broadcast %cst_11 : f32 to vector<2x32xf32>
    %9 = arith.divf %7, %8 : vector<2x32xf32>
    %c0_12 = arith.constant 0 : index
    %c0_13 = arith.constant 0 : index
    %10 = vector.load %arg3[%c0_12, %c0_13] : memref<4x64xbf16, #tpu.memory_space<vmem>>, vector<4x64xbf16>
    %11 = vector.extract_strided_slice %0 {offsets = [0, 0], sizes = [1, 64], strides = [1, 1]} : vector<9x64xf32> to vector<1x64xf32>
    %12 = vector.extract_strided_slice %0 {offsets = [1, 0], sizes = [1, 64], strides = [1, 1]} : vector<9x64xf32> to vector<1x64xf32>
    %13 = vector.extract_strided_slice %0 {offsets = [2, 0], sizes = [1, 64], strides = [1, 1]} : vector<9x64xf32> to vector<1x64xf32>
    %c0_14 = arith.constant 0 : index
    %c0_15 = arith.constant 0 : index
    %c0_16 = arith.constant 0 : index
    %14 = vector.load %arg6[%c0_14, %c0_15, %c0_16] : memref<3x64x32xbf16, #tpu.memory_space<vmem>>, vector<1x64x32xbf16>
    %15 = vector.shape_cast %14 : vector<1x64x32xbf16> to vector<64x32xbf16>
    %16 = vector.extract_strided_slice %1 {offsets = [0, 0], sizes = [1, 32], strides = [1, 1]} : vector<3x32xf32> to vector<1x32xf32>
    %17 = arith.truncf %5 : vector<2x4xf32> to vector<2x4xbf16>
    %cst_17 = arith.constant dense<0.000000e+00> : vector<2x64xf32>
    %18 = tpu.matmul %17, %10, %cst_17 {dimension_numbers = #tpu.dot_dimension_numbers<[1], [0], [0], [1], [0, 0, 1, 1], [], []>} : vector<2x4xbf16>, vector<4x64xbf16>, vector<2x64xf32> -> vector<2x64xf32>
    %19 = vector.broadcast %11 : vector<1x64xf32> to vector<2x64xf32>
    %20 = arith.addf %18, %19 : vector<2x64xf32>
    %cst_18 = arith.constant dense<0.000000e+00> : vector<2xf32>
    %21 = vector.multi_reduction <add>, %20, %cst_18 [1] : vector<2x64xf32> to vector<2xf32>
    %22 = vector.shape_cast %21 : vector<2xf32> to vector<2x1xf32>
    %cst_19 = arith.constant 6.400000e+01 : f32
    %23 = vector.broadcast %cst_19 : f32 to vector<2x1xf32>
    %24 = arith.divf %22, %23 : vector<2x1xf32>
    %25 = vector.broadcast %24 : vector<2x1xf32> to vector<2x64xf32>
    %26 = arith.subf %20, %25 : vector<2x64xf32>
    %27 = arith.mulf %26, %26 : vector<2x64xf32>
    %cst_20 = arith.constant dense<0.000000e+00> : vector<2xf32>
    %28 = vector.multi_reduction <add>, %27, %cst_20 [1] : vector<2x64xf32> to vector<2xf32>
    %29 = vector.shape_cast %28 : vector<2xf32> to vector<2x1xf32>
    %cst_21 = arith.constant 6.400000e+01 : f32
    %30 = vector.broadcast %cst_21 : f32 to vector<2x1xf32>
    %31 = arith.divf %29, %30 : vector<2x1xf32>
    %32 = vector.broadcast %24 : vector<2x1xf32> to vector<2x64xf32>
    %33 = arith.subf %20, %32 : vector<2x64xf32>
    %cst_22 = arith.constant 9.99999974E-6 : f32
    %34 = vector.broadcast %cst_22 : f32 to vector<2x1xf32>
    %35 = arith.addf %31, %34 : vector<2x1xf32>
    %36 = math.rsqrt %35 : vector<2x1xf32>
    %37 = vector.broadcast %36 : vector<2x1xf32> to vector<2x64xf32>
    %38 = arith.mulf %33, %37 : vector<2x64xf32>
    %39 = vector.broadcast %12 : vector<1x64xf32> to vector<2x64xf32>
    %40 = arith.mulf %38, %39 : vector<2x64xf32>
    %41 = vector.broadcast %13 : vector<1x64xf32> to vector<2x64xf32>
    %42 = arith.addf %40, %41 : vector<2x64xf32>
    %cst_23 = arith.constant 5.000000e-01 : f32
    %43 = vector.broadcast %cst_23 : f32 to vector<2x64xf32>
    %44 = arith.mulf %43, %42 : vector<2x64xf32>
    %cst_24 = arith.constant 0.707106769 : f32
    %45 = vector.broadcast %cst_24 : f32 to vector<2x64xf32>
    %46 = arith.mulf %42, %45 : vector<2x64xf32>
    %47 = math.erf %46 : vector<2x64xf32>
    %cst_25 = arith.constant 1.000000e+00 : f32
    %48 = vector.broadcast %cst_25 : f32 to vector<2x64xf32>
    %49 = arith.addf %48, %47 : vector<2x64xf32>
    %50 = arith.mulf %44, %49 : vector<2x64xf32>
    %51 = arith.truncf %50 : vector<2x64xf32> to vector<2x64xbf16>
    %cst_26 = arith.constant dense<0.000000e+00> : vector<2x32xf32>
    %52 = tpu.matmul %51, %15, %cst_26 {dimension_numbers = #tpu.dot_dimension_numbers<[1], [0], [0], [1], [0, 0, 1, 1], [], []>} : vector<2x64xbf16>, vector<64x32xbf16>, vector<2x32xf32> -> vector<2x32xf32>
    %53 = vector.broadcast %16 : vector<1x32xf32> to vector<2x32xf32>
    %54 = arith.addf %52, %53 : vector<2x32xf32>
    %c0_27 = arith.constant 0 : index
    %c0_28 = arith.constant 0 : index
    %55 = vector.load %arg4[%c0_27, %c0_28] : memref<32x64xbf16, #tpu.memory_space<vmem>>, vector<32x64xbf16>
    %56 = vector.extract_strided_slice %0 {offsets = [3, 0], sizes = [1, 64], strides = [1, 1]} : vector<9x64xf32> to vector<1x64xf32>
    %57 = vector.extract_strided_slice %0 {offsets = [4, 0], sizes = [1, 64], strides = [1, 1]} : vector<9x64xf32> to vector<1x64xf32>
    %58 = vector.extract_strided_slice %0 {offsets = [5, 0], sizes = [1, 64], strides = [1, 1]} : vector<9x64xf32> to vector<1x64xf32>
    %c1 = arith.constant 1 : index
    %c0_29 = arith.constant 0 : index
    %c0_30 = arith.constant 0 : index
    %59 = vector.load %arg6[%c1, %c0_29, %c0_30] : memref<3x64x32xbf16, #tpu.memory_space<vmem>>, vector<1x64x32xbf16>
    %60 = vector.shape_cast %59 : vector<1x64x32xbf16> to vector<64x32xbf16>
    %61 = vector.extract_strided_slice %1 {offsets = [1, 0], sizes = [1, 32], strides = [1, 1]} : vector<3x32xf32> to vector<1x32xf32>
    %62 = arith.truncf %9 : vector<2x32xf32> to vector<2x32xbf16>
    %cst_31 = arith.constant dense<0.000000e+00> : vector<2x64xf32>
    %63 = tpu.matmul %62, %55, %cst_31 {dimension_numbers = #tpu.dot_dimension_numbers<[1], [0], [0], [1], [0, 0, 1, 1], [], []>} : vector<2x32xbf16>, vector<32x64xbf16>, vector<2x64xf32> -> vector<2x64xf32>
    %64 = vector.broadcast %56 : vector<1x64xf32> to vector<2x64xf32>
    %65 = arith.addf %63, %64 : vector<2x64xf32>
    %cst_32 = arith.constant dense<0.000000e+00> : vector<2xf32>
    %66 = vector.multi_reduction <add>, %65, %cst_32 [1] : vector<2x64xf32> to vector<2xf32>
    %67 = vector.shape_cast %66 : vector<2xf32> to vector<2x1xf32>
    %cst_33 = arith.constant 6.400000e+01 : f32
    %68 = vector.broadcast %cst_33 : f32 to vector<2x1xf32>
    %69 = arith.divf %67, %68 : vector<2x1xf32>
    %70 = vector.broadcast %69 : vector<2x1xf32> to vector<2x64xf32>
    %71 = arith.subf %65, %70 : vector<2x64xf32>
    %72 = arith.mulf %71, %71 : vector<2x64xf32>
    %cst_34 = arith.constant dense<0.000000e+00> : vector<2xf32>
    %73 = vector.multi_reduction <add>, %72, %cst_34 [1] : vector<2x64xf32> to vector<2xf32>
    %74 = vector.shape_cast %73 : vector<2xf32> to vector<2x1xf32>
    %cst_35 = arith.constant 6.400000e+01 : f32
    %75 = vector.broadcast %cst_35 : f32 to vector<2x1xf32>
    %76 = arith.divf %74, %75 : vector<2x1xf32>
    %77 = vector.broadcast %69 : vector<2x1xf32> to vector<2x64xf32>
    %78 = arith.subf %65, %77 : vector<2x64xf32>
    %cst_36 = arith.constant 9.99999974E-6 : f32
    %79 = vector.broadcast %cst_36 : f32 to vector<2x1xf32>
    %80 = arith.addf %76, %79 : vector<2x1xf32>
    %81 = math.rsqrt %80 : vector<2x1xf32>
    %82 = vector.broadcast %81 : vector<2x1xf32> to vector<2x64xf32>
    %83 = arith.mulf %78, %82 : vector<2x64xf32>
    %84 = vector.broadcast %57 : vector<1x64xf32> to vector<2x64xf32>
    %85 = arith.mulf %83, %84 : vector<2x64xf32>
    %86 = vector.broadcast %58 : vector<1x64xf32> to vector<2x64xf32>
    %87 = arith.addf %85, %86 : vector<2x64xf32>
    %cst_37 = arith.constant 5.000000e-01 : f32
    %88 = vector.broadcast %cst_37 : f32 to vector<2x64xf32>
    %89 = arith.mulf %88, %87 : vector<2x64xf32>
    %cst_38 = arith.constant 0.707106769 : f32
    %90 = vector.broadcast %cst_38 : f32 to vector<2x64xf32>
    %91 = arith.mulf %87, %90 : vector<2x64xf32>
    %92 = math.erf %91 : vector<2x64xf32>
    %cst_39 = arith.constant 1.000000e+00 : f32
    %93 = vector.broadcast %cst_39 : f32 to vector<2x64xf32>
    %94 = arith.addf %93, %92 : vector<2x64xf32>
    %95 = arith.mulf %89, %94 : vector<2x64xf32>
    %96 = arith.truncf %95 : vector<2x64xf32> to vector<2x64xbf16>
    %cst_40 = arith.constant dense<0.000000e+00> : vector<2x32xf32>
    %97 = tpu.matmul %96, %60, %cst_40 {dimension_numbers = #tpu.dot_dimension_numbers<[1], [0], [0], [1], [0, 0, 1, 1], [], []>} : vector<2x64xbf16>, vector<64x32xbf16>, vector<2x32xf32> -> vector<2x32xf32>
    %98 = vector.broadcast %61 : vector<1x32xf32> to vector<2x32xf32>
    %99 = arith.addf %97, %98 : vector<2x32xf32>
    %c0_41 = arith.constant 0 : index
    %c0_42 = arith.constant 0 : index
    %100 = vector.load %arg5[%c0_41, %c0_42] : memref<32x64xbf16, #tpu.memory_space<vmem>>, vector<32x64xbf16>
    %101 = vector.extract_strided_slice %0 {offsets = [6, 0], sizes = [1, 64], strides = [1, 1]} : vector<9x64xf32> to vector<1x64xf32>
    %102 = vector.extract_strided_slice %0 {offsets = [7, 0], sizes = [1, 64], strides = [1, 1]} : vector<9x64xf32> to vector<1x64xf32>
    %103 = vector.extract_strided_slice %0 {offsets = [8, 0], sizes = [1, 64], strides = [1, 1]} : vector<9x64xf32> to vector<1x64xf32>
    %c2 = arith.constant 2 : index
    %c0_43 = arith.constant 0 : index
    %c0_44 = arith.constant 0 : index
    %104 = vector.load %arg6[%c2, %c0_43, %c0_44] : memref<3x64x32xbf16, #tpu.memory_space<vmem>>, vector<1x64x32xbf16>
    %105 = vector.shape_cast %104 : vector<1x64x32xbf16> to vector<64x32xbf16>
    %106 = vector.extract_strided_slice %1 {offsets = [2, 0], sizes = [1, 32], strides = [1, 1]} : vector<3x32xf32> to vector<1x32xf32>
    %107 = arith.truncf %54 : vector<2x32xf32> to vector<2x32xbf16>
    %cst_45 = arith.constant dense<0.000000e+00> : vector<2x64xf32>
    %108 = tpu.matmul %107, %100, %cst_45 {dimension_numbers = #tpu.dot_dimension_numbers<[1], [0], [0], [1], [0, 0, 1, 1], [], []>} : vector<2x32xbf16>, vector<32x64xbf16>, vector<2x64xf32> -> vector<2x64xf32>
    %109 = vector.broadcast %101 : vector<1x64xf32> to vector<2x64xf32>
    %110 = arith.addf %108, %109 : vector<2x64xf32>
    %cst_46 = arith.constant dense<0.000000e+00> : vector<2xf32>
    %111 = vector.multi_reduction <add>, %110, %cst_46 [1] : vector<2x64xf32> to vector<2xf32>
    %112 = vector.shape_cast %111 : vector<2xf32> to vector<2x1xf32>
    %cst_47 = arith.constant 6.400000e+01 : f32
    %113 = vector.broadcast %cst_47 : f32 to vector<2x1xf32>
    %114 = arith.divf %112, %113 : vector<2x1xf32>
    %115 = vector.broadcast %114 : vector<2x1xf32> to vector<2x64xf32>
    %116 = arith.subf %110, %115 : vector<2x64xf32>
    %117 = arith.mulf %116, %116 : vector<2x64xf32>
    %cst_48 = arith.constant dense<0.000000e+00> : vector<2xf32>
    %118 = vector.multi_reduction <add>, %117, %cst_48 [1] : vector<2x64xf32> to vector<2xf32>
    %119 = vector.shape_cast %118 : vector<2xf32> to vector<2x1xf32>
    %cst_49 = arith.constant 6.400000e+01 : f32
    %120 = vector.broadcast %cst_49 : f32 to vector<2x1xf32>
    %121 = arith.divf %119, %120 : vector<2x1xf32>
    %122 = vector.broadcast %114 : vector<2x1xf32> to vector<2x64xf32>
    %123 = arith.subf %110, %122 : vector<2x64xf32>
    %cst_50 = arith.constant 9.99999974E-6 : f32
    %124 = vector.broadcast %cst_50 : f32 to vector<2x1xf32>
    %125 = arith.addf %121, %124 : vector<2x1xf32>
    %126 = math.rsqrt %125 : vector<2x1xf32>
    %127 = vector.broadcast %126 : vector<2x1xf32> to vector<2x64xf32>
    %128 = arith.mulf %123, %127 : vector<2x64xf32>
    %129 = vector.broadcast %102 : vector<1x64xf32> to vector<2x64xf32>
    %130 = arith.mulf %128, %129 : vector<2x64xf32>
    %131 = vector.broadcast %103 : vector<1x64xf32> to vector<2x64xf32>
    %132 = arith.addf %130, %131 : vector<2x64xf32>
    %cst_51 = arith.constant 5.000000e-01 : f32
    %133 = vector.broadcast %cst_51 : f32 to vector<2x64xf32>
    %134 = arith.mulf %133, %132 : vector<2x64xf32>
    %cst_52 = arith.constant 0.707106769 : f32
    %135 = vector.broadcast %cst_52 : f32 to vector<2x64xf32>
    %136 = arith.mulf %132, %135 : vector<2x64xf32>
    %137 = math.erf %136 : vector<2x64xf32>
    %cst_53 = arith.constant 1.000000e+00 : f32
    %138 = vector.broadcast %cst_53 : f32 to vector<2x64xf32>
    %139 = arith.addf %138, %137 : vector<2x64xf32>
    %140 = arith.mulf %134, %139 : vector<2x64xf32>
    %141 = arith.truncf %140 : vector<2x64xf32> to vector<2x64xbf16>
    %cst_54 = arith.constant dense<0.000000e+00> : vector<2x32xf32>
    %142 = tpu.matmul %141, %105, %cst_54 {dimension_numbers = #tpu.dot_dimension_numbers<[1], [0], [0], [1], [0, 0, 1, 1], [], []>} : vector<2x64xbf16>, vector<64x32xbf16>, vector<2x32xf32> -> vector<2x32xf32>
    %143 = vector.broadcast %106 : vector<1x32xf32> to vector<2x32xf32>
    %144 = arith.addf %142, %143 : vector<2x32xf32>
    %c0_55 = arith.constant 0 : index
    %c0_56 = arith.constant 0 : index
    %145 = vector.load %arg9[%c0_55, %c0_56] : memref<2x32xf32, #tpu.memory_space<vmem>>, vector<2x32xf32>
    tpu.vector_store %arg9[%c0_55, %c0_56], %54 {strides = array<i32>} : memref<2x32xf32, #tpu.memory_space<vmem>>, vector<2x32xf32>,
    %c0_57 = arith.constant 0 : index
    %c0_58 = arith.constant 0 : index
    %146 = vector.load %arg10[%c0_57, %c0_58] : memref<2x32xf32, #tpu.memory_space<vmem>>, vector<2x32xf32>
    tpu.vector_store %arg10[%c0_57, %c0_58], %99 {strides = array<i32>} : memref<2x32xf32, #tpu.memory_space<vmem>>, vector<2x32xf32>,
    %c0_59 = arith.constant 0 : index
    %c0_60 = arith.constant 0 : index
    %147 = vector.load %arg11[%c0_59, %c0_60] : memref<2x32xf32, #tpu.memory_space<vmem>>, vector<2x32xf32>
    tpu.vector_store %arg11[%c0_59, %c0_60], %144 {strides = array<i32>} : memref<2x32xf32, #tpu.memory_space<vmem>>, vector<2x32xf32>,
    %148 = arith.mulf %99, %99 : vector<2x32xf32>
    %cst_61 = arith.constant dense<0.000000e+00> : vector<2xf32>
    %149 = vector.multi_reduction <add>, %148, %cst_61 [1] : vector<2x32xf32> to vector<2xf32>
    %150 = vector.shape_cast %149 : vector<2xf32> to vector<2x1xf32>
    %cst_62 = arith.constant 1.000000e-24 : f32
    %151 = vector.broadcast %cst_62 : f32 to vector<2x1xf32>
    %152 = arith.maximumf %150, %151 : vector<2x1xf32>
    %153 = math.rsqrt %152 : vector<2x1xf32>
    %154 = vector.broadcast %153 : vector<2x1xf32> to vector<2x32xf32>
    %155 = arith.mulf %99, %154 : vector<2x32xf32>
    %c0_63 = arith.constant 0 : index
    %c0_64 = arith.constant 0 : index
    %156 = vector.load %arg13[%c0_63, %c0_64] : memref<2x32xf32, #tpu.memory_space<vmem>>, vector<2x32xf32>
    tpu.vector_store %arg13[%c0_63, %c0_64], %155 {strides = array<i32>} : memref<2x32xf32, #tpu.memory_space<vmem>>, vector<2x32xf32>,
    %157 = arith.mulf %144, %144 : vector<2x32xf32>
    %cst_65 = arith.constant dense<0.000000e+00> : vector<2xf32>
    %158 = vector.multi_reduction <add>, %157, %cst_65 [1] : vector<2x32xf32> to vector<2xf32>
    %159 = vector.shape_cast %158 : vector<2xf32> to vector<2x1xf32>
    %cst_66 = arith.constant 1.000000e-24 : f32
    %160 = vector.broadcast %cst_66 : f32 to vector<2x1xf32>
    %161 = arith.maximumf %159, %160 : vector<2x1xf32>
    %162 = math.rsqrt %161 : vector<2x1xf32>
    %163 = vector.broadcast %162 : vector<2x1xf32> to vector<2x32xf32>
    %164 = arith.mulf %144, %163 : vector<2x32xf32>
    %cst_67 = arith.constant 5.000000e-01 : f32
    %165 = vector.broadcast %cst_67 : f32 to vector<2x32xf32>
    %166 = arith.mulf %164, %165 : vector<2x32xf32>
    %c0_68 = arith.constant 0 : index
    %c0_69 = arith.constant 0 : index
    %167 = vector.load %arg12[%c0_68, %c0_69] : memref<2x32xf32, #tpu.memory_space<vmem>>, vector<2x32xf32>
    tpu.vector_store %arg12[%c0_68, %c0_69], %166 {strides = array<i32>} : memref<2x32xf32, #tpu.memory_space<vmem>>, vector<2x32xf32>,
    return
  }
  func.func @transform_0(%arg0: i32) -> (i32, i32, i32) {
    %c0_i32 = arith.constant 0 : i32
    %c0_i32_0 = arith.constant 0 : i32
    %c0_i32_1 = arith.constant 0 : i32
    return %arg0, %c0_i32, %c0_i32_0 : i32, i32, i32
  }
  func.func @transform_1(%arg0: i32) -> (i32, i32, i32) {
    %c0_i32 = arith.constant 0 : i32
    %c0_i32_0 = arith.constant 0 : i32
    %c0_i32_1 = arith.constant 0 : i32
    return %arg0, %c0_i32, %c0_i32_0 : i32, i32, i32
  }
  func.func @transform_2(%arg0: i32) -> (i32, i32) {
    %c0_i32 = arith.constant 0 : i32
    %c0_i32_0 = arith.constant 0 : i32
    %c0_i32_1 = arith.constant 0 : i32
    return %c0_i32, %c0_i32_0 : i32, i32
  }
  func.func @transform_3(%arg0: i32) -> (i32, i32) {
    %c0_i32 = arith.constant 0 : i32
    %c0_i32_0 = arith.constant 0 : i32
    %c0_i32_1 = arith.constant 0 : i32
    return %c0_i32, %c0_i32_0 : i32, i32
  }
  func.func @transform_4(%arg0: i32) -> (i32, i32) {
    %c0_i32 = arith.constant 0 : i32
    %c0_i32_0 = arith.constant 0 : i32
    %c0_i32_1 = arith.constant 0 : i32
    return %c0_i32, %c0_i32_0 : i32, i32
  }
  func.func @transform_5(%arg0: i32) -> (i32, i32, i32) {
    %c0_i32 = arith.constant 0 : i32
    %c0_i32_0 = arith.constant 0 : i32
    %c0_i32_1 = arith.constant 0 : i32
    %c0_i32_2 = arith.constant 0 : i32
    return %c0_i32, %c0_i32_0, %c0_i32_1 : i32, i32, i32
  }
  func.func @transform_6(%arg0: i32) -> (i32, i32) {
    %c0_i32 = arith.constant 0 : i32
    %c0_i32_0 = arith.constant 0 : i32
    %c0_i32_1 = arith.constant 0 : i32
    return %c0_i32, %c0_i32_0 : i32, i32
  }
  func.func @transform_7(%arg0: i32) -> (i32, i32) {
    %c0_i32 = arith.constant 0 : i32
    %c0_i32_0 = arith.constant 0 : i32
    %c0_i32_1 = arith.constant 0 : i32
    return %c0_i32, %c0_i32_0 : i32, i32
  }
  func.func @transform_8(%arg0: i32) -> (i32, i32) {
    %c0_i32 = arith.constant 0 : i32
    %c0_i32_0 = arith.constant 0 : i32
    return %arg0, %c0_i32 : i32, i32
  }
  func.func @transform_9(%arg0: i32) -> (i32, i32) {
    %c0_i32 = arith.constant 0 : i32
    %c0_i32_0 = arith.constant 0 : i32
    return %arg0, %c0_i32 : i32, i32
  }
  func.func @transform_10(%arg0: i32) -> (i32, i32) {
    %c0_i32 = arith.constant 0 : i32
    %c0_i32_0 = arith.constant 0 : i32
    return %arg0, %c0_i32 : i32, i32
  }
  func.func @transform_11(%arg0: i32) -> (i32, i32) {
    %c0_i32 = arith.constant 0 : i32
    %c0_i32_0 = arith.constant 0 : i32
    return %arg0, %c0_i32 : i32, i32
  }
  func.func @transform_12(%arg0: i32) -> (i32, i32) {
    %c0_i32 = arith.constant 0 : i32
    %c0_i32_0 = arith.constant 0 : i32
    return %arg0, %c0_i32 : i32, i32
  }
}

</mosaic_0001>

<llo_original>
// kernel: tpu_custom_call.1
$region0: #{tpu_custom_call.1}
  #allocation0 [shape = 'u32[]', space=smem, size = 0x4, offset = 0x4, fixed_abs, tag = 'smem constant byte address 0x4 - core index']
  #allocation1 [shape = 'u32[144,128]{1,0:T(1,128)}', space=vmem, size = 0x12000, scoped, tag = 'internal scratch']
  %s0 = inlined_call_operand.vmem [shape: f32[2,4,256], index: 0, kind: input, shape index: {}]
  %s1 = inlined_call_operand.vmem [shape: f32[2,8,32], index: 1, kind: input, shape index: {}]
  %s2 = inlined_call_operand.vmem [shape: bf16[4,64], index: 2, kind: input, shape index: {}]
  %s3 = inlined_call_operand.vmem [shape: bf16[32,64], index: 3, kind: input, shape index: {}]
  %s4 = inlined_call_operand.vmem [shape: bf16[32,64], index: 4, kind: input, shape index: {}]
  %s5 = inlined_call_operand.vmem [shape: bf16[3,64,32], index: 5, kind: input, shape index: {}]
  %s6 = inlined_call_operand.vmem [shape: f32[9,64], index: 6, kind: input, shape index: {}]
  %s7 = inlined_call_operand.vmem [shape: f32[3,32], index: 7, kind: input, shape index: {}]
  %s8 = inlined_call_operand.hbm [shape: f32[2,32], index: 8, kind: output, shape index: {0}]
  %s9 = inlined_call_operand.hbm [shape: f32[2,32], index: 9, kind: output, shape index: {1}]
  %s10 = inlined_call_operand.hbm [shape: f32[2,32], index: 10, kind: output, shape index: {2}]
  %s11 = inlined_call_operand.hbm [shape: f32[2,32], index: 11, kind: output, shape index: {3}]
  %s12 = inlined_call_operand.hbm [shape: f32[2,32], index: 12, kind: output, shape index: {4}]
  %13 = xla_tuple %s8, %s9, %s10, %s11, %s12
  %s14 = sld [smem:[#allocation0]]
  $region74: #{tpu_custom_call.1} parent=0
    _
  %s16 = ssub.s32 1, %s14
  %s17 = scalar_select 0, %s16, %s14
  $region1: #{tpu_custom_call.1} parent=0
    #allocation2 [shape = 'u8[1024]{0}', space=vmem, size = 0x400, scoped, tag = 'output window, operand 0, single buffered']
    #allocation3 [shape = 's32[1]{0}', space=sflag, size = 0x4, scoped, tag = 'scoped memory for tpu_custom_call.1']
    #allocation4 [shape = 'u8[1024]{0}', space=vmem, size = 0x400, scoped, tag = 'output window, operand 1, single buffered']
    #allocation5 [shape = 's32[1]{0}', space=sflag, size = 0x4, scoped, tag = 'scoped memory for tpu_custom_call.1']
    #allocation6 [shape = 'u8[1024]{0}', space=vmem, size = 0x400, scoped, tag = 'output window, operand 2, single buffered']
    #allocation7 [shape = 'u8[1024]{0}', space=vmem, size = 0x400, scoped, tag = 'output window, operand 3, single buffered']
    #allocation8 [shape = 's32[1]{0}', space=sflag, size = 0x4, scoped, tag = 'scoped memory for tpu_custom_call.1']
    #allocation9 [shape = 'u8[1024]{0}', space=vmem, size = 0x400, scoped, tag = 'output window, operand 4, single buffered']
    %18 = vsyncpa [#allocation3], 0
    %19 = vsyncpa [#allocation5], 0
    %20 = vsyncpa [#allocation8], 0
    // Predicated region
    $region2: #{tpu_custom_call.1} parent=1 // pred_check
      _
    $region3: #{tpu_custom_call.1} parent=1 // pred_check_branch
      %22 = sbr.rel (0) target = $region5
    $region4: #{tpu_custom_call.1} parent=1 // pred_region
      _
    $region5: #{tpu_custom_call.1} parent=1 // pred_fallthru
      _
    // Predicated region
    $region6: #{tpu_custom_call.1} parent=1 // pred_check
      _
    $region7: #{tpu_custom_call.1} parent=1 // pred_check_branch
      %24 = sbr.rel (0) target = $region9
    $region8: #{tpu_custom_call.1} parent=1 // pred_region
      _
    $region9: #{tpu_custom_call.1} parent=1 // pred_fallthru
      _
    // Predicated region
    $region10: #{tpu_custom_call.1} parent=1 // pred_check
      _
    $region11: #{tpu_custom_call.1} parent=1 // pred_check_branch
      %26 = sbr.rel (0) target = $region13
    $region12: #{tpu_custom_call.1} parent=1 // pred_region
      _
    $region13: #{tpu_custom_call.1} parent=1 // pred_fallthru
      _
    // Predicated region
    $region14: #{tpu_custom_call.1} parent=1 // pred_check
      _
    $region15: #{tpu_custom_call.1} parent=1 // pred_check_branch
      %28 = sbr.rel (0) target = $region17
    $region16: #{tpu_custom_call.1} parent=1 // pred_region
      _
    $region17: #{tpu_custom_call.1} parent=1 // pred_fallthru
      _
    // Predicated region
    $region18: #{tpu_custom_call.1} parent=1 // pred_check
      _
    $region19: #{tpu_custom_call.1} parent=1 // pred_check_branch
      %30 = sbr.rel (0) target = $region21
    $region20: #{tpu_custom_call.1} parent=1 // pred_region
      _
    $region21: #{tpu_custom_call.1} parent=1 // pred_fallthru
      _
    // Predicated region
    $region22: #{tpu_custom_call.1} parent=1 // pred_check
      _
    $region23: #{tpu_custom_call.1} parent=1 // pred_check_branch
      %32 = sbr.rel (0) target = $region25
    $region24: #{tpu_custom_call.1} parent=1 // pred_region
      _
    $region25: #{tpu_custom_call.1} parent=1 // pred_fallthru
      _
    // Predicated region
    $region26: #{tpu_custom_call.1} parent=1 // pred_check
      _
    $region27: #{tpu_custom_call.1} parent=1 // pred_check_branch
      %34 = sbr.rel (0) target = $region29
    $region28: #{tpu_custom_call.1} parent=1 // pred_region
      _
    $region29: #{tpu_custom_call.1} parent=1 // pred_fallthru
      _
    // Predicated region
    $region30: #{tpu_custom_call.1} parent=1 // pred_check
      _
    $region31: #{tpu_custom_call.1} parent=1 // pred_check_branch
      %36 = sbr.rel (0) target = $region33
    $region32: #{tpu_custom_call.1} parent=1 // pred_region
      _
    $region33: #{tpu_custom_call.1} parent=1 // pred_fallthru
      _
    %v38 = vld [vmem:[%s6] sm:$0xff]
    %v39 = vld [vmem:[%s6 + $0x8] sm:$0x1]
    %v40 = vld [vmem:[%s7] sm:$0x7]
    %v41 = vld [vmem:[%s0] sm:$0xff]
    %v42 = vld [vmem:[%s0 + $0x8] sm:$0xff]
    %v45 = vcombine.high %v41, %v41
    %v46 = vcombine.high %v42, %v42
    %vm49 = vcmask 1043456
    %v50 = vsel %vm49, %v41, 0.0
    %v51 = vsel %vm49, %v45, 0.0
    %v52 = vadd.f32 %v50, %v51
    %53 = vadd.xlane.f32.xlu0 %v52
    %v54 = vpop.xlane.xlu0 %53
    %v55 = vsel %vm49, %v42, 0.0
    %v56 = vsel %vm49, %v46, 0.0
    %v57 = vadd.f32 %v55, %v56
    %58 = vadd.xlane.f32.xlu0 %v57
    %v59 = vpop.xlane.xlu0 %58
    %v60 = vrcp.pop 256.0
    %v61 = vmul.f32 %v54, %v60
    %v62 = vmul.f32 %v59, %v60
    %v63 = vld [vmem:[%s1] sm:$0xff]
    %v64 = vld [vmem:[%s1 + $0x8] sm:$0xff]
    %vm65 = vcmask 261120
    %v66 = vsel %vm65, %v63, 0.0
    %v67 = vrot.slane %v66, 4
    %v68 = vadd.f32 %v66, %v67
    %v69 = vrot.slane %v68, 2
    %v70 = vadd.f32 %v68, %v69
    %v71 = vrot.slane %v70, 1
    %v72 = vadd.f32 %v70, %v71
    %v73 = vsel %vm65, %v64, 0.0
    %v74 = vrot.slane %v73, 4
    %v75 = vadd.f32 %v73, %v74
    %v76 = vrot.slane %v75, 2
    %v77 = vadd.f32 %v75, %v76
    %v78 = vrot.slane %v77, 1
    %v79 = vadd.f32 %v77, %v78
    %v80 = vrcp.pop 8.0
    %v81 = vmul.f32 %v72, %v80
    %v82 = vmul.f32 %v79, %v80
    %v83 = vld [vmem:[%s2] sm:$0x3]
    %v84 = vld [vmem:[%s5] sm:$0xf]
    %v85 = vld [vmem:[%s5 + $0x4] sm:$0xf]
    %v86 = vld [vmem:[%s5 + $0x8] sm:$0xf]
    %v87 = vld [vmem:[%s5 + $0xc] sm:$0xf]
    %v88 = vld [vmem:[%s5 + $0x10] sm:$0xf]
    %v89 = vld [vmem:[%s5 + $0x14] sm:$0xf]
    %v90 = vld [vmem:[%s5 + $0x18] sm:$0xf]
    %v91 = vld [vmem:[%s5 + $0x1c] sm:$0xf]
    %v92 = vpack.c.bf16 %v61, %v61
    %v93 = vpack.c.bf16 %v62, %v62
    %v94 = vlaneseq
    %v95 = vshrl.u32 %v94, 7
    %v96 = vsub.s32 0, %v95
    %v97 = vrot.slane %v38, %v96
    %v100 = vunpack.c.l.b16 %v92
    %v101 = vunpack.c.l.b16 %v93
    %v102 = vlaneseq
    %v103 = vand.u32 %v102, 127
    %v104 = vlaneseq
    %v105 = vshrl.u32 %v104, 7
    %v106 = vsub.s32 %v103, %v105
    %v107 = vrot.slane %v100, %v106
    %v108 = vlaneseq
    %v109 = vshrl.u32 %v108, 7
    %v110 = vsub.s32 %v103, %v109
    %v111 = vrot.slane %v101, %v110
    %vm112 = vcmask 1041409
    %v113 = vsel %vm112, %v111, %v107
    %v114 = vpack.c.b16 %v113, %v113
    %vm115 = vcmask 31744
    %v117 = vsel %vm115, %v114, 0
    %vm119 = vcmask 1041408
    %v121 = vsel %vm119, %v83, 0
    %123 = vmatprep.subr.bf16.mxu0 0
    %124 = vmatpush1.bf16.msra.mxu0 %v121
    %125 = vmatprep.subr.bf16.mxu0 0
    %126 = vmatpush1.bf16.msra.mxu0 0
    %127 = vmatprep.subr.bf16.mxu0 0
    %128 = vmatpush1.bf16.msra.mxu0 0
    %129 = vmatprep.subr.bf16.mxu0 0
    %130 = vmatpush1.bf16.msra.mxu0 0
    %131 = vmatprep.subr.bf16.mxu0 0
    %132 = vmatpush1.bf16.msra.mxu0 0
    %133 = vmatprep.subr.bf16.mxu0 0
    %134 = vmatpush1.bf16.msra.mxu0 0
    %135 = vmatprep.subr.bf16.mxu0 0
    %136 = vmatpush1.bf16.msra.mxu0 0
    %137 = vmatprep.subr.bf16.mxu0 0
    %138 = vmatpush1.bf16.msra.mxu0 0
    %139 = vmatprep.subr.bf16.mxu0 0
    %140 = vmatpush1.bf16.msra.mxu0 0
    %141 = vmatprep.subr.bf16.mxu0 0
    %142 = vmatpush1.bf16.msra.mxu0 0
    %143 = vmatprep.subr.bf16.mxu0 0
    %144 = vmatpush1.bf16.msra.mxu0 0
    %145 = vmatprep.subr.bf16.mxu0 0
    %146 = vmatpush1.bf16.msra.mxu0 0
    %147 = vmatprep.subr.bf16.mxu0 0
    %148 = vmatpush1.bf16.msra.mxu0 0
    %149 = vmatprep.subr.bf16.mxu0 0
    %150 = vmatpush1.bf16.msra.mxu0 0
    %151 = vmatprep.subr.bf16.mxu0 0
    %152 = vmatpush1.bf16.msra.mxu0 0
    %153 = vmatprep.subr.bf16.mxu0 0
    %154 = vmatpush1.bf16.msra.mxu0 0
    %155 = vmatprep.mubr.bf16.mxu0 0
    %156 = vmatmul.mubr.bf16.gmra.mrb[0].mxu0 %v117
    %v157 = vpop.f32.mrb[0].mxu0
    %v158 = vadd.f32 %v97, %v157
    %v159 = vpop.f32.mrb[0].mxu0
    %v160 = vpop.f32.mrb[0].mxu0
    %v161 = vpop.f32.mrb[0].mxu0
    %162 = vdwg.mxu0
    %vm163 = vcmask 517120
    %v164 = vsel %vm163, %v158, 0.0
    %165 = vadd.xlane.f32.xlu0 %v164
    %v166 = vpop.xlane.xlu0 %165
    %v167 = vrcp.pop 64.0
    %v168 = vmul.f32 %v166, %v167
    %v169 = vsub.f32 %v158, %v168
    %v170 = vmul.f32 %v169, %v169
    %v171 = vsel %vm163, %v170, 0.0
    %172 = vadd.xlane.f32.xlu0 %v171
    %v173 = vpop.xlane.xlu0 %172
    %v174 = vmul.f32 %v173, %v167
    %v175 = vadd.f32 %v174, 1e-05
    %v176 = vrsqrt.pop %v175
    %v177 = vmul.f32 %v169, %v176
    %v178 = vlaneseq
    %v179 = vshrl.u32 %v178, 7
    %v180 = vsub.s32 1, %v179
    %v181 = vrot.slane %v38, %v180
    %v182 = vmul.f32 %v177, %v181
    %v183 = vlaneseq
    %v184 = vshrl.u32 %v183, 7
    %v185 = vsub.s32 2, %v184
    %v186 = vrot.slane %v38, %v185
    %v187 = vadd.f32 %v182, %v186
    %v188 = vmul.f32 %v187, 0.5
    %v189 = vmul.f32 %v187, 0.70710677
    %v190 = verf.f32.pop %v189
    %v191 = vadd.f32 %v190, 1.0
    %v192 = vmul.f32 %v188, %v191
    %v193 = vpack.c.bf16 %v192, %v192
    %v194 = vlaneseq
    %v195 = vshrl.u32 %v194, 7
    %v196 = vsub.s32 0, %v195
    %v197 = vrot.slane %v40, %v196
    %v206 = vunpack.c.l.b16 %v84
    %v207 = vunpack.c.l.b16 %v85
    %v208 = vunpack.c.l.b16 %v86
    %v209 = vunpack.c.l.b16 %v87
    %v210 = vunpack.c.l.b16 %v88
    %v211 = vunpack.c.l.b16 %v89
    %v212 = vunpack.c.l.b16 %v90
    %v213 = vunpack.c.l.b16 %v91
    %v214 = vpack.c.b16 %v207, %v206
    %v215 = vpack.c.b16 %v209, %v208
    %v216 = vpack.c.b16 %v211, %v210
    %v217 = vpack.c.b16 %v213, %v212
    %vm222 = vcmask 523264
    %v224 = vsel %vm222, %v193, 0
    %226 = vmatprep.subr.bf16.mxu0 0
    %227 = vmatpush1.bf16.msra.mxu0 %v214
    %228 = vmatprep.subr.bf16.mxu0 0
    %229 = vmatpush1.bf16.msra.mxu0 %v215
    %230 = vmatprep.subr.bf16.mxu0 0
    %231 = vmatpush1.bf16.msra.mxu0 %v216
    %232 = vmatprep.subr.bf16.mxu0 0
    %233 = vmatpush1.bf16.msra.mxu0 %v217
    %234 = vmatprep.subr.bf16.mxu0 0
    %235 = vmatpush1.bf16.msra.mxu0 0
    %236 = vmatprep.subr.bf16.mxu0 0
    %237 = vmatpush1.bf16.msra.mxu0 0
    %238 = vmatprep.subr.bf16.mxu0 0
    %239 = vmatpush1.bf16.msra.mxu0 0
    %240 = vmatprep.subr.bf16.mxu0 0
    %241 = vmatpush1.bf16.msra.mxu0 0
    %242 = vmatprep.subr.bf16.mxu0 0
    %243 = vmatpush1.bf16.msra.mxu0 0
    %244 = vmatprep.subr.bf16.mxu0 0
    %245 = vmatpush1.bf16.msra.mxu0 0
    %246 = vmatprep.subr.bf16.mxu0 0
    %247 = vmatpush1.bf16.msra.mxu0 0
    %248 = vmatprep.subr.bf16.mxu0 0
    %249 = vmatpush1.bf16.msra.mxu0 0
    %250 = vmatprep.subr.bf16.mxu0 0
    %251 = vmatpush1.bf16.msra.mxu0 0
    %252 = vmatprep.subr.bf16.mxu0 0
    %253 = vmatpush1.bf16.msra.mxu0 0
    %254 = vmatprep.subr.bf16.mxu0 0
    %255 = vmatpush1.bf16.msra.mxu0 0
    %256 = vmatprep.subr.bf16.mxu0 0
    %257 = vmatpush1.bf16.msra.mxu0 0
    %258 = vmatprep.mubr.bf16.mxu0 0
    %259 = vmatmul.mubr.bf16.gmra.mrb[0].mxu0 %v224
    %v260 = vpop.f32.mrb[0].mxu0
    %v261 = vadd.f32 %v197, %v260
    %v262 = vpop.f32.mrb[0].mxu0
    %v263 = vpop.f32.mrb[0].mxu0
    %v264 = vpop.f32.mrb[0].mxu0
    %265 = vdwg.mxu0
    %v266 = vld [vmem:[%s3] sm:$0xf]
    %v267 = vld [vmem:[%s3 + $0x4] sm:$0xf]
    %v268 = vld [vmem:[%s3 + $0x8] sm:$0xf]
    %v269 = vld [vmem:[%s3 + $0xc] sm:$0xf]
    %s270 = scalar_lea.vmem %s5, 32
    %v271 = vld [vmem:[%s270] sm:$0xf]
    %v272 = vld [vmem:[%s270 + $0x4] sm:$0xf]
    %v273 = vld [vmem:[%s270 + $0x8] sm:$0xf]
    %v274 = vld [vmem:[%s270 + $0xc] sm:$0xf]
    %v275 = vld [vmem:[%s270 + $0x10] sm:$0xf]
    %v276 = vld [vmem:[%s270 + $0x14] sm:$0xf]
    %v277 = vld [vmem:[%s270 + $0x18] sm:$0xf]
    %v278 = vld [vmem:[%s270 + $0x1c] sm:$0xf]
    %v279 = vpack.c.bf16 %v81, %v81
    %v280 = vpack.c.bf16 %v82, %v82
    %v281 = vlaneseq
    %v282 = vshrl.u32 %v281, 7
    %v283 = vsub.s32 3, %v282
    %v284 = vrot.slane %v38, %v283
    %v287 = vunpack.c.l.b16 %v279
    %v288 = vunpack.c.l.b16 %v280
    %v289 = vsel %vm112, %v288, %v287
    %v290 = vpack.c.b16 %v289, %v289
    %v295 = vunpack.c.l.b16 %v266
    %v296 = vunpack.c.l.b16 %v267
    %v297 = vunpack.c.l.b16 %v268
    %v298 = vunpack.c.l.b16 %v269
    %v299 = vpack.c.b16 %v296, %v295
    %v300 = vpack.c.b16 %v298, %v297
    %v304 = vsel %vm65, %v290, 0
    %306 = vmatprep.subr.bf16.mxu0 0
    %307 = vmatpush1.bf16.msra.mxu0 %v299
    %308 = vmatprep.subr.bf16.mxu0 0
    %309 = vmatpush1.bf16.msra.mxu0 %v300
    %310 = vmatprep.subr.bf16.mxu0 0
    %311 = vmatpush1.bf16.msra.mxu0 0
    %312 = vmatprep.subr.bf16.mxu0 0
    %313 = vmatpush1.bf16.msra.mxu0 0
    %314 = vmatprep.subr.bf16.mxu0 0
    %315 = vmatpush1.bf16.msra.mxu0 0
    %316 = vmatprep.subr.bf16.mxu0 0
    %317 = vmatpush1.bf16.msra.mxu0 0
    %318 = vmatprep.subr.bf16.mxu0 0
    %319 = vmatpush1.bf16.msra.mxu0 0
    %320 = vmatprep.subr.bf16.mxu0 0
    %321 = vmatpush1.bf16.msra.mxu0 0
    %322 = vmatprep.subr.bf16.mxu0 0
    %323 = vmatpush1.bf16.msra.mxu0 0
    %324 = vmatprep.subr.bf16.mxu0 0
    %325 = vmatpush1.bf16.msra.mxu0 0
    %326 = vmatprep.subr.bf16.mxu0 0
    %327 = vmatpush1.bf16.msra.mxu0 0
    %328 = vmatprep.subr.bf16.mxu0 0
    %329 = vmatpush1.bf16.msra.mxu0 0
    %330 = vmatprep.subr.bf16.mxu0 0
    %331 = vmatpush1.bf16.msra.mxu0 0
    %332 = vmatprep.subr.bf16.mxu0 0
    %333 = vmatpush1.bf16.msra.mxu0 0
    %334 = vmatprep.subr.bf16.mxu0 0
    %335 = vmatpush1.bf16.msra.mxu0 0
    %336 = vmatprep.subr.bf16.mxu0 0
    %337 = vmatpush1.bf16.msra.mxu0 0
    %338 = vmatprep.mubr.bf16.mxu0 0
    %339 = vmatmul.mubr.bf16.gmra.mrb[0].mxu0 %v304
    %v340 = vpop.f32.mrb[0].mxu0
    %v341 = vadd.f32 %v284, %v340
    %v342 = vpop.f32.mrb[0].mxu0
    %v343 = vpop.f32.mrb[0].mxu0
    %v344 = vpop.f32.mrb[0].mxu0
    %345 = vdwg.mxu0
    %v346 = vsel %vm163, %v341, 0.0
    %347 = vadd.xlane.f32.xlu0 %v346
    %v348 = vpop.xlane.xlu0 %347
    %v349 = vmul.f32 %v348, %v167
    %v350 = vsub.f32 %v341, %v349
    %v351 = vmul.f32 %v350, %v350
    %v352 = vsel %vm163, %v351, 0.0
    %353 = vadd.xlane.f32.xlu0 %v352
    %v354 = vpop.xlane.xlu0 %353
    %v355 = vmul.f32 %v354, %v167
    %v356 = vadd.f32 %v355, 1e-05
    %v357 = vrsqrt.pop %v356
    %v358 = vmul.f32 %v350, %v357
    %v359 = vlaneseq
    %v360 = vshrl.u32 %v359, 7
    %v361 = vsub.s32 4, %v360
    %v362 = vrot.slane %v38, %v361
    %v363 = vmul.f32 %v358, %v362
    %v364 = vlaneseq
    %v365 = vshrl.u32 %v364, 7
    %v366 = vsub.s32 5, %v365
    %v367 = vrot.slane %v38, %v366
    %v368 = vadd.f32 %v363, %v367
    %v369 = vmul.f32 %v368, 0.5
    %v370 = vmul.f32 %v368, 0.70710677
    %v371 = verf.f32.pop %v370
    %v372 = vadd.f32 %v371, 1.0
    %v373 = vmul.f32 %v369, %v372
    %v374 = vpack.c.bf16 %v373, %v373
    %v375 = vlaneseq
    %v376 = vshrl.u32 %v375, 7
    %v377 = vsub.s32 1, %v376
    %v378 = vrot.slane %v40, %v377
    %v387 = vunpack.c.l.b16 %v271
    %v388 = vunpack.c.l.b16 %v272
    %v389 = vunpack.c.l.b16 %v273
    %v390 = vunpack.c.l.b16 %v274
    %v391 = vunpack.c.l.b16 %v275
    %v392 = vunpack.c.l.b16 %v276
    %v393 = vunpack.c.l.b16 %v277
    %v394 = vunpack.c.l.b16 %v278
    %v395 = vpack.c.b16 %v388, %v387
    %v396 = vpack.c.b16 %v390, %v389
    %v397 = vpack.c.b16 %v392, %v391
    %v398 = vpack.c.b16 %v394, %v393
    %v404 = vsel %vm222, %v374, 0
    %406 = vmatprep.subr.bf16.mxu0 0
    %407 = vmatpush1.bf16.msra.mxu0 %v395
    %408 = vmatprep.subr.bf16.mxu0 0
    %409 = vmatpush1.bf16.msra.mxu0 %v396
    %410 = vmatprep.subr.bf16.mxu0 0
    %411 = vmatpush1.bf16.msra.mxu0 %v397
    %412 = vmatprep.subr.bf16.mxu0 0
    %413 = vmatpush1.bf16.msra.mxu0 %v398
    %414 = vmatprep.subr.bf16.mxu0 0
    %415 = vmatpush1.bf16.msra.mxu0 0
    %416 = vmatprep.subr.bf16.mxu0 0
    %417 = vmatpush1.bf16.msra.mxu0 0
    %418 = vmatprep.subr.bf16.mxu0 0
    %419 = vmatpush1.bf16.msra.mxu0 0
    %420 = vmatprep.subr.bf16.mxu0 0
    %421 = vmatpush1.bf16.msra.mxu0 0
    %422 = vmatprep.subr.bf16.mxu0 0
    %423 = vmatpush1.bf16.msra.mxu0 0
    %424 = vmatprep.subr.bf16.mxu0 0
    %425 = vmatpush1.bf16.msra.mxu0 0
    %426 = vmatprep.subr.bf16.mxu0 0
    %427 = vmatpush1.bf16.msra.mxu0 0
    %428 = vmatprep.subr.bf16.mxu0 0
    %429 = vmatpush1.bf16.msra.mxu0 0
    %430 = vmatprep.subr.bf16.mxu0 0
    %431 = vmatpush1.bf16.msra.mxu0 0
    %432 = vmatprep.subr.bf16.mxu0 0
    %433 = vmatpush1.bf16.msra.mxu0 0
    %434 = vmatprep.subr.bf16.mxu0 0
    %435 = vmatpush1.bf16.msra.mxu0 0
    %436 = vmatprep.subr.bf16.mxu0 0
    %437 = vmatpush1.bf16.msra.mxu0 0
    %438 = vmatprep.mubr.bf16.mxu0 0
    %439 = vmatmul.mubr.bf16.gmra.mrb[0].mxu0 %v404
    %v440 = vpop.f32.mrb[0].mxu0
    %v441 = vadd.f32 %v378, %v440
    %v442 = vpop.f32.mrb[0].mxu0
    %v443 = vpop.f32.mrb[0].mxu0
    %v444 = vpop.f32.mrb[0].mxu0
    %445 = vdwg.mxu0
    %v446 = vld [vmem:[%s4] sm:$0xf]
    %v447 = vld [vmem:[%s4 + $0x4] sm:$0xf]
    %v448 = vld [vmem:[%s4 + $0x8] sm:$0xf]
    %v449 = vld [vmem:[%s4 + $0xc] sm:$0xf]
    %s450 = scalar_lea.vmem %s5, 64
    %v451 = vld [vmem:[%s450] sm:$0xf]
    %v452 = vld [vmem:[%s450 + $0x4] sm:$0xf]
    %v453 = vld [vmem:[%s450 + $0x8] sm:$0xf]
    %v454 = vld [vmem:[%s450 + $0xc] sm:$0xf]
    %v455 = vld [vmem:[%s450 + $0x10] sm:$0xf]
    %v456 = vld [vmem:[%s450 + $0x14] sm:$0xf]
    %v457 = vld [vmem:[%s450 + $0x18] sm:$0xf]
    %v458 = vld [vmem:[%s450 + $0x1c] sm:$0xf]
    %v459 = vpack.c.bf16 %v261, %v261
    %v460 = vlaneseq
    %v461 = vshrl.u32 %v460, 7
    %v462 = vsub.s32 6, %v461
    %v463 = vrot.slane %v38, %v462
    %v468 = vunpack.c.l.b16 %v446
    %v469 = vunpack.c.l.b16 %v447
    %v470 = vunpack.c.l.b16 %v448
    %v471 = vunpack.c.l.b16 %v449
    %v472 = vpack.c.b16 %v469, %v468
    %v473 = vpack.c.b16 %v471, %v470
    %v477 = vsel %vm65, %v459, 0
    %479 = vmatprep.subr.bf16.mxu0 0
    %480 = vmatpush1.bf16.msra.mxu0 %v472
    %481 = vmatprep.subr.bf16.mxu0 0
    %482 = vmatpush1.bf16.msra.mxu0 %v473
    %483 = vmatprep.subr.bf16.mxu0 0
    %484 = vmatpush1.bf16.msra.mxu0 0
    %485 = vmatprep.subr.bf16.mxu0 0
    %486 = vmatpush1.bf16.msra.mxu0 0
    %487 = vmatprep.subr.bf16.mxu0 0
    %488 = vmatpush1.bf16.msra.mxu0 0
    %489 = vmatprep.subr.bf16.mxu0 0
    %490 = vmatpush1.bf16.msra.mxu0 0
    %491 = vmatprep.subr.bf16.mxu0 0
    %492 = vmatpush1.bf16.msra.mxu0 0
    %493 = vmatprep.subr.bf16.mxu0 0
    %494 = vmatpush1.bf16.msra.mxu0 0
    %495 = vmatprep.subr.bf16.mxu0 0
    %496 = vmatpush1.bf16.msra.mxu0 0
    %497 = vmatprep.subr.bf16.mxu0 0
    %498 = vmatpush1.bf16.msra.mxu0 0
    %499 = vmatprep.subr.bf16.mxu0 0
    %500 = vmatpush1.bf16.msra.mxu0 0
    %501 = vmatprep.subr.bf16.mxu0 0
    %502 = vmatpush1.bf16.msra.mxu0 0
    %503 = vmatprep.subr.bf16.mxu0 0
    %504 = vmatpush1.bf16.msra.mxu0 0
    %505 = vmatprep.subr.bf16.mxu0 0
    %506 = vmatpush1.bf16.msra.mxu0 0
    %507 = vmatprep.subr.bf16.mxu0 0
    %508 = vmatpush1.bf16.msra.mxu0 0
    %509 = vmatprep.subr.bf16.mxu0 0
    %510 = vmatpush1.bf16.msra.mxu0 0
    %511 = vmatprep.mubr.bf16.mxu0 0
    %512 = vmatmul.mubr.bf16.gmra.mrb[0].mxu0 %v477
    %v513 = vpop.f32.mrb[0].mxu0
    %v514 = vadd.f32 %v463, %v513
    %v515 = vpop.f32.mrb[0].mxu0
    %v516 = vpop.f32.mrb[0].mxu0
    %v517 = vpop.f32.mrb[0].mxu0
    %518 = vdwg.mxu0
    %v519 = vsel %vm163, %v514, 0.0
    %520 = vadd.xlane.f32.xlu0 %v519
    %v521 = vpop.xlane.xlu0 %520
    %v522 = vmul.f32 %v521, %v167
    %v523 = vsub.f32 %v514, %v522
    %v524 = vmul.f32 %v523, %v523
    %v525 = vsel %vm163, %v524, 0.0
    %526 = vadd.xlane.f32.xlu0 %v525
    %v527 = vpop.xlane.xlu0 %526
    %v528 = vmul.f32 %v527, %v167
    %v529 = vadd.f32 %v528, 1e-05
    %v530 = vrsqrt.pop %v529
    %v531 = vmul.f32 %v523, %v530
    %v532 = vlaneseq
    %v533 = vshrl.u32 %v532, 7
    %v534 = vsub.s32 7, %v533
    %v535 = vrot.slane %v38, %v534
    %v536 = vmul.f32 %v531, %v535
    %v537 = vlaneseq
    %v538 = vshrl.u32 %v537, 7
    %v539 = vsub.s32 0, %v538
    %v540 = vrot.slane %v39, %v539
    %v541 = vadd.f32 %v536, %v540
    %v542 = vmul.f32 %v541, 0.5
    %v543 = vmul.f32 %v541, 0.70710677
    %v544 = verf.f32.pop %v543
    %v545 = vadd.f32 %v544, 1.0
    %v546 = vmul.f32 %v542, %v545
    %v547 = vpack.c.bf16 %v546, %v546
    %v548 = vlaneseq
    %v549 = vshrl.u32 %v548, 7
    %v550 = vsub.s32 2, %v549
    %v551 = vrot.slane %v40, %v550
    %v560 = vunpack.c.l.b16 %v451
    %v561 = vunpack.c.l.b16 %v452
    %v562 = vunpack.c.l.b16 %v453
    %v563 = vunpack.c.l.b16 %v454
    %v564 = vunpack.c.l.b16 %v455
    %v565 = vunpack.c.l.b16 %v456
    %v566 = vunpack.c.l.b16 %v457
    %v567 = vunpack.c.l.b16 %v458
    %v568 = vpack.c.b16 %v561, %v560
    %v569 = vpack.c.b16 %v563, %v562
    %v570 = vpack.c.b16 %v565, %v564
    %v571 = vpack.c.b16 %v567, %v566
    %v577 = vsel %vm222, %v547, 0
    %579 = vmatprep.subr.bf16.mxu0 0
    %580 = vmatpush1.bf16.msra.mxu0 %v568
    %581 = vmatprep.subr.bf16.mxu0 0
    %582 = vmatpush1.bf16.msra.mxu0 %v569
    %583 = vmatprep.subr.bf16.mxu0 0
    %584 = vmatpush1.bf16.msra.mxu0 %v570
    %585 = vmatprep.subr.bf16.mxu0 0
    %586 = vmatpush1.bf16.msra.mxu0 %v571
    %587 = vmatprep.subr.bf16.mxu0 0
    %588 = vmatpush1.bf16.msra.mxu0 0
    %589 = vmatprep.subr.bf16.mxu0 0
    %590 = vmatpush1.bf16.msra.mxu0 0
    %591 = vmatprep.subr.bf16.mxu0 0
    %592 = vmatpush1.bf16.msra.mxu0 0
    %593 = vmatprep.subr.bf16.mxu0 0
    %594 = vmatpush1.bf16.msra.mxu0 0
    %595 = vmatprep.subr.bf16.mxu0 0
    %596 = vmatpush1.bf16.msra.mxu0 0
    %597 = vmatprep.subr.bf16.mxu0 0
    %598 = vmatpush1.bf16.msra.mxu0 0
    %599 = vmatprep.subr.bf16.mxu0 0
    %600 = vmatpush1.bf16.msra.mxu0 0
    %601 = vmatprep.subr.bf16.mxu0 0
    %602 = vmatpush1.bf16.msra.mxu0 0
    %603 = vmatprep.subr.bf16.mxu0 0
    %604 = vmatpush1.bf16.msra.mxu0 0
    %605 = vmatprep.subr.bf16.mxu0 0
    %606 = vmatpush1.bf16.msra.mxu0 0
    %607 = vmatprep.subr.bf16.mxu0 0
    %608 = vmatpush1.bf16.msra.mxu0 0
    %609 = vmatprep.subr.bf16.mxu0 0
    %610 = vmatpush1.bf16.msra.mxu0 0
    %611 = vmatprep.mubr.bf16.mxu0 0
    %612 = vmatmul.mubr.bf16.gmra.mrb[0].mxu0 %v577
    %v613 = vpop.f32.mrb[0].mxu0
    %v614 = vadd.f32 %v551, %v613
    %v615 = vpop.f32.mrb[0].mxu0
    %v616 = vpop.f32.mrb[0].mxu0
    %v617 = vpop.f32.mrb[0].mxu0
    %618 = vdwg.mxu0
    %vm619 = vcmask 254976
    %620 = vst.msk [vmem:[#allocation2] sm:$0x3] %vm619, %v261
    %621 = vst.msk [vmem:[#allocation4] sm:$0x3] %vm619, %v441
    %622 = vst.msk [vmem:[#allocation6] sm:$0x3] %vm619, %v614
    %v623 = vmul.f32 %v441, %v441
    %v624 = vsel %vm619, %v623, 0.0
    %625 = vadd.xlane.f32.xlu0 %v624
    %v626 = vpop.xlane.xlu0 %625
    %v627 = vmax.f32 %v626, 1e-24
    %v628 = vrsqrt.pop %v627
    %v629 = vmul.f32 %v441, %v628
    %630 = vst.msk [vmem:[#allocation9] sm:$0x3] %vm619, %v629
    %v631 = vmul.f32 %v614, %v614
    %v632 = vsel %vm619, %v631, 0.0
    %633 = vadd.xlane.f32.xlu0 %v632
    %v634 = vpop.xlane.xlu0 %633
    %v635 = vmax.f32 %v634, 1e-24
    %v636 = vrsqrt.pop %v635
    %v637 = vmul.f32 %v614, %v636
    %v638 = vmul.f32 %v637, 0.5
    %639 = vst.msk [vmem:[#allocation7] sm:$0x3] %vm619, %v638
    // Predicated region
    $region34: #{tpu_custom_call.1} parent=1 // pred_check
      _
    $region35: #{tpu_custom_call.1} parent=1 // pred_check_branch
      %641 = sbr.rel (0) target = $region37
    $region36: #{tpu_custom_call.1} parent=1 // pred_region
      %s643 = ssub.s32 32, 32
      %644 = vsyncadd [#allocation3], %s643
      %s646 = sshll.u32 [#allocation2], 4
      %s647 = int_to_ptr.vmem [resolvable:$true] %s646
      %649 = dma.vmem_to_hbm [thread:$0]  %s647, 32, %s8, [#allocation3]
    $region37: #{tpu_custom_call.1} parent=1 // pred_fallthru
      _
    // Predicated region
    $region38: #{tpu_custom_call.1} parent=1 // pred_check
      _
    $region39: #{tpu_custom_call.1} parent=1 // pred_check_branch
      %651 = sbr.rel (0) target = $region41
    $region40: #{tpu_custom_call.1} parent=1 // pred_region
      %s653 = ssub.s32 32, 32
      %654 = vsyncadd [#allocation5], %s653
      %s656 = sshll.u32 [#allocation4], 4
      %s657 = int_to_ptr.vmem [resolvable:$true] %s656
      %659 = dma.vmem_to_hbm [thread:$0]  %s657, 32, %s9, [#allocation5]
    $region41: #{tpu_custom_call.1} parent=1 // pred_fallthru
      _
    // Predicated region
    $region42: #{tpu_custom_call.1} parent=1 // pred_check
      _
    $region43: #{tpu_custom_call.1} parent=1 // pred_check_branch
      %661 = sbr.rel (0) target = $region45
    $region44: #{tpu_custom_call.1} parent=1 // pred_region
      %s663 = ssub.s32 32, 32
      %664 = vsyncadd [#allocation5], %s663
      %s666 = sshll.u32 [#allocation6], 4
      %s667 = int_to_ptr.vmem [resolvable:$true] %s666
      %669 = dma.vmem_to_hbm [thread:$0]  %s667, 32, %s10, [#allocation5]
    $region45: #{tpu_custom_call.1} parent=1 // pred_fallthru
      _
    // Predicated region
    $region46: #{tpu_custom_call.1} parent=1 // pred_check
      _
    $region47: #{tpu_custom_call.1} parent=1 // pred_check_branch
      %671 = sbr.rel (0) target = $region49
    $region48: #{tpu_custom_call.1} parent=1 // pred_region
      %s673 = ssub.s32 32, 32
      %674 = vsyncadd [#allocation8], %s673
      %s676 = sshll.u32 [#allocation7], 4
      %s677 = int_to_ptr.vmem [resolvable:$true] %s676
      %679 = dma.vmem_to_hbm [thread:$0]  %s677, 32, %s11, [#allocation8]
    $region49: #{tpu_custom_call.1} parent=1 // pred_fallthru
      _
    // Predicated region
    $region50: #{tpu_custom_call.1} parent=1 // pred_check
      _
    $region51: #{tpu_custom_call.1} parent=1 // pred_check_branch
      %681 = sbr.rel (0) target = $region53
    $region52: #{tpu_custom_call.1} parent=1 // pred_region
      %s683 = ssub.s32 32, 32
      %684 = vsyncadd [#allocation8], %s683
      %s686 = sshll.u32 [#allocation9], 4
      %s687 = int_to_ptr.vmem [resolvable:$true] %s686
      %689 = dma.vmem_to_hbm [thread:$0]  %s687, 32, %s12, [#allocation8]
    $region53: #{tpu_custom_call.1} parent=1 // pred_fallthru
      _
    // Predicated region
    $region54: #{tpu_custom_call.1} parent=1 // pred_check
      _
    $region55: #{tpu_custom_call.1} parent=1 // pred_check_branch
      %691 = sbr.rel (0) target = $region57
    $region56: #{tpu_custom_call.1} parent=1 // pred_region
      %692 = dma.done [#allocation3], 32
    $region57: #{tpu_custom_call.1} parent=1 // pred_fallthru
      _
    // Predicated region
    $region58: #{tpu_custom_call.1} parent=1 // pred_check
      _
    $region59: #{tpu_custom_call.1} parent=1 // pred_check_branch
      %694 = sbr.rel (0) target = $region61
    $region60: #{tpu_custom_call.1} parent=1 // pred_region
      %695 = dma.done [#allocation5], 32
    $region61: #{tpu_custom_call.1} parent=1 // pred_fallthru
      _
    // Predicated region
    $region62: #{tpu_custom_call.1} parent=1 // pred_check
      _
    $region63: #{tpu_custom_call.1} parent=1 // pred_check_branch
      %697 = sbr.rel (0) target = $region65
    $region64: #{tpu_custom_call.1} parent=1 // pred_region
      %698 = dma.done [#allocation5], 32
    $region65: #{tpu_custom_call.1} parent=1 // pred_fallthru
      _
    // Predicated region
    $region66: #{tpu_custom_call.1} parent=1 // pred_check
      _
    $region67: #{tpu_custom_call.1} parent=1 // pred_check_branch
      %700 = sbr.rel (0) target = $region69
    $region68: #{tpu_custom_call.1} parent=1 // pred_region
      %701 = dma.done [#allocation8], 32
    $region69: #{tpu_custom_call.1} parent=1 // pred_fallthru
      _
    // Predicated region
    $region70: #{tpu_custom_call.1} parent=1 // pred_check
      _
    $region71: #{tpu_custom_call.1} parent=1 // pred_check_branch
      %703 = sbr.rel (0) target = $region73
    $region72: #{tpu_custom_call.1} parent=1 // pred_region
      %704 = dma.done [#allocation8], 32
    $region73: #{tpu_custom_call.1} parent=1 // pred_fallthru
      _
    %705 = vsyncpa [#allocation3], 1
    %706 = vsyncpa [#allocation5], 1
    %707 = vsyncpa [#allocation8], 1

</llo_original>
